<compile_context>
chip_gen: v5e
topology: v5e:2x2
jax: 0.10.0
libtpu: 0.0.40
codegen_flags: <defaults>
</compile_context>

<pallas_src>
import functools

import jax
import jax.numpy as jnp
from jax.experimental import pallas as pl
from jax.experimental.pallas import tpu as pltpu


def _shift_kernel(shift_ref, x_ref, o_ref, pad_ref, *, tile_n, c, h, w, pad):
    """One grid step: shift `tile_n` images by their per-image integer offsets.

    shift_ref : SMEM (2*N,) int32, flat [sy_0, sx_0, sy_1, sx_1, ...], each in [0, 2*pad]
    x_ref     : VMEM (tile_n, c, h, w) input block
    o_ref     : VMEM (tile_n, c, h, w) output block
    pad_ref   : VMEM (c, h + 2*pad, w) scratch (row-replicate-padded image)
    """
    base = pl.program_id(0) * tile_n

    # Static iotas for the column one-hot selector (shared by the whole tile).
    col_l = jax.lax.broadcasted_iota(jnp.int32, (w, w), 0)   # source column l
    col_j = jax.lax.broadcasted_iota(jnp.int32, (w, w), 1)   # output column j

    def body(t, carry):
        sy = shift_ref[2 * (base + t)]          # row shift in [0, 2*pad]
        sx = shift_ref[2 * (base + t) + 1]      # col shift in [0, 2*pad]
        dx = sx - pad                           # col shift in [-pad, pad]

        xt = x_ref[t]                           # (c, h, w)

        # ---- row gather: replicate-pad along H, then dynamic sublane slice ----
        #   pad_ref[:, r, :] = xt[:, clamp(r - pad, 0, h-1), :]
        pad_ref[:, pad:pad + h, :] = xt
        pad_ref[:, :pad, :] = jnp.broadcast_to(xt[:, :1, :], (c, pad, w))
        pad_ref[:, pad + h:, :] = jnp.broadcast_to(xt[:, h - 1:, :], (c, pad, w))
        rowed = pad_ref[:, pl.ds(sy, h), :]     # (c, h, w): rows clamp(i + sy - pad)

        # ---- column gather: single folded one-hot matmul on the MXU -----------
        #   sel_c[l, j] = 1  iff  l == clamp(j + dx, 0, w-1)
        sel_c = (col_l == jnp.clip(col_j + dx, 0, w - 1)).astype(jnp.float32)
        y = jnp.dot(rowed.reshape(c * h, w).astype(jnp.float32), sel_c,
                    preferred_element_type=jnp.float32)       # (c*h, w)

        o_ref[t] = y.reshape(c, h, w).astype(o_ref.dtype)
        return carry

    jax.lax.fori_loop(0, tile_n, body, 0, unroll=True)


def _pick_tile_n(n, per_sample_bytes, vmem_budget_bytes):
    """Largest divisor of n whose double-buffered in+out block fits the budget."""
    cap = max(1, int(vmem_budget_bytes) // (4 * per_sample_bytes))
    cap = min(cap, 16, n)        # 8-16/step amortizes grid overhead; safe on v7x (64 MiB VMEM)
    if cap >= n and n > 1:       # keep >= 2 grid steps so "parallel" can use both v7x cores
        cap = max(1, n // 2)
    t = cap
    while n % t:
        t -= 1
    return t


def random_shifts_aug(x, shifts, pad, *, tile_n=None, vmem_budget_bytes=16 << 20):
    """Pallas RandomShiftsAug forward.

    x      : (N, C, H, W) array, H == W.
    shifts : (N, 2) int32 per-image [row_shift, col_shift], each drawn from
             randint(0, 2*pad + 1) -- replaces torch.randint in the module.
    pad    : replicate-padding amount (DrQ-v2 uses 4).
    """
    n, c, h, w = x.shape
    assert h == w, "RandomShiftsAug requires square images"
    if pad == 0:
        return x

    shifts_flat = jnp.asarray(shifts, jnp.int32).reshape(-1)   # flat 1-D SMEM table
    assert shifts_flat.shape == (2 * n,)

    itemsize = x.dtype.itemsize
    per_sample_bytes = c * h * w * itemsize
    if tile_n is None:
        tile_n = _pick_tile_n(n, per_sample_bytes, vmem_budget_bytes)
    assert n % tile_n == 0, "batch must be divisible by tile_n"
    grid = (n // tile_n,)

    kernel = functools.partial(_shift_kernel, tile_n=tile_n, c=c, h=h, w=w, pad=pad)

    # Double-buffered in+out blocks + padded-row scratch, with headroom; capped
    # at 64 MiB so the same limit is valid on v5e/v6e (128 MiB) and v7x (64 MiB).
    tile_bytes = tile_n * per_sample_bytes
    scratch_bytes = c * (h + 2 * pad) * w * itemsize
    vmem_limit = int(min(64 << 20,
                         max(32 << 20, 4 * tile_bytes + 2 * scratch_bytes + (4 << 20))))

    cost = pl.CostEstimate(
        flops=2 * n * c * h * w * w,                    # one folded one-hot matmul / image
        transcendentals=0,
        bytes_accessed=2 * n * c * h * w * itemsize)    # otherwise pure data movement

    return pl.pallas_call(
        kernel,
        out_shape=jax.ShapeDtypeStruct((n, c, h, w), x.dtype),
        grid_spec=pltpu.PrefetchScalarGridSpec(
            num_scalar_prefetch=1,                      # shifts -> SMEM
            grid=grid,
            in_specs=[pl.BlockSpec((tile_n, c, h, w), lambda i, s: (i, 0, 0, 0))],
            out_specs=pl.BlockSpec((tile_n, c, h, w), lambda i, s: (i, 0, 0, 0)),
            scratch_shapes=[pltpu.VMEM((c, h + 2 * pad, w), x.dtype)],
        ),
        compiler_params=pltpu.CompilerParams(
            dimension_semantics=("parallel",),
            vmem_limit_bytes=vmem_limit,
        ),
        cost_estimate=cost,
    )(shifts_flat, x)


def random_shifts_reference(x, shifts, pad):
    """Pure-JAX reference: replicate pad + per-image integer shift (the exact
    value of the PyTorch forward at these grid points)."""
    n, c, h, w = x.shape
    xp = jnp.pad(x, ((0, 0), (0, 0), (pad, pad), (pad, pad)), mode="edge")
    outs = []
    for b in range(n):
        sy = int(shifts[b, 0])
        sx = int(shifts[b, 1])
        outs.append(xp[b, :, sy:sy + h, sx:sx + w])
    return jnp.stack(outs)


if __name__ == "__main__":
    # Small shapes consistent with the module: (batch, channels, H, W), pad=4.
    N, C, H, W, PAD = 8, 4, 16, 16, 4

    key = jax.random.PRNGKey(0)
    k_x, k_s = jax.random.split(key)
    x = jax.random.normal(k_x, (N, C, H, W), jnp.float32)
    # torch.randint(0, 2*pad+1, (N,1,1,2)) equivalent, drawn with jax.random.
    # TODO(synk): torch's RNG stream itself is not reproducible from JAX; the
    # shifts are drawn host-side and fed to the kernel via SMEM scalar prefetch.
    shifts = jax.random.randint(k_s, (N, 2), 0, 2 * PAD + 1, dtype=jnp.int32)

    out = random_shifts_aug(x, shifts, PAD)     # tile_n=4 -> grid=(2,)
    jax.block_until_ready(out)

    ref = random_shifts_reference(x, shifts, PAD)
    assert out.shape == x.shape
    assert jnp.allclose(out, ref, atol=1e-5, rtol=1e-5)

    print("KERNEL_OK")
</pallas_src>

<mosaic_0001>
module attributes {stable_mosaic.version = 11 : i64} {
  func.func @_shift_kernel(%arg0: i32, %arg1: memref<16xi32, #tpu.memory_space<smem>>, %arg2: memref<4x4x16x16xf32, #tpu.memory_space<vmem>>, %arg3: memref<4x4x16x16xf32, #tpu.memory_space<vmem>>, %arg4: memref<4x24x16xf32, #tpu.memory_space<vmem>>) attributes {dimension_semantics = [#tpu.dimension_semantics<parallel>], iteration_bounds = array<i64: 2>, scalar_prefetch = 1 : i64, scratch_operands = 1 : i64, tpu.core_type = #tpu.core_type<tc>, window_params = [{transform_indices = @transform_0, window_bounds = array<i64: 4, 4, 16, 16>}, {transform_indices = @transform_1, window_bounds = array<i64: 4, 4, 16, 16>}]} {
    %c4_i32 = arith.constant 4 : i32
    %0 = arith.muli %arg0, %c4_i32 : i32
    %1 = tpu.iota {dimensions = array<i32: 0>} : vector<16x16xi32>
    %2 = tpu.iota {dimensions = array<i32: 1>} : vector<16x16xi32>
    %c0_i32 = arith.constant 0 : i32
    %3 = arith.addi %0, %c0_i32 : i32
    %c2_i32 = arith.constant 2 : i32
    %4 = arith.muli %c2_i32, %3 : i32
    %5 = arith.index_cast %4 : i32 to index
    %6 = memref.load %arg1[%5] : memref<16xi32, #tpu.memory_space<smem>>
    %7 = arith.addi %0, %c0_i32 : i32
    %c2_i32_0 = arith.constant 2 : i32
    %8 = arith.muli %c2_i32_0, %7 : i32
    %c1_i32 = arith.constant 1 : i32
    %9 = arith.addi %8, %c1_i32 : i32
    %10 = arith.index_cast %9 : i32 to index
    %11 = memref.load %arg1[%10] : memref<16xi32, #tpu.memory_space<smem>>
    %c4_i32_1 = arith.constant 4 : i32
    %12 = arith.subi %11, %c4_i32_1 : i32
    %13 = arith.index_cast %c0_i32 : i32 to index
    %c0 = arith.constant 0 : index
    %c0_2 = arith.constant 0 : index
    %c0_3 = arith.constant 0 : index
    %14 = vector.load %arg2[%13, %c0, %c0_2, %c0_3] : memref<4x4x16x16xf32, #tpu.memory_space<vmem>>, vector<1x4x16x16xf32>
    %15 = vector.shape_cast %14 : vector<1x4x16x16xf32> to vector<4x16x16xf32>
    %c0_4 = arith.constant 0 : index
    %c4 = arith.constant 4 : index
    %c0_5 = arith.constant 0 : index
    %16 = vector.load %arg4[%c0_4, %c4, %c0_5] : memref<4x24x16xf32, #tpu.memory_space<vmem>>, vector<4x16x16xf32>
    tpu.vector_store %arg4[%c0_4, %c4, %c0_5], %15 {strides = array<i32>} : memref<4x24x16xf32, #tpu.memory_space<vmem>>, vector<4x16x16xf32>,
    %17 = vector.extract_strided_slice %15 {offsets = [0, 0, 0], sizes = [4, 1, 16], strides = [1, 1, 1]} : vector<4x16x16xf32> to vector<4x1x16xf32>
    %18 = vector.shape_cast %17 : vector<4x1x16xf32> to vector<4x1x16xf32>
    %19 = vector.broadcast %18 : vector<4x1x16xf32> to vector<4x4x16xf32>
    %c0_6 = arith.constant 0 : index
    %c0_7 = arith.constant 0 : index
    %c0_8 = arith.constant 0 : index
    %20 = vector.load %arg4[%c0_6, %c0_7, %c0_8] : memref<4x24x16xf32, #tpu.memory_space<vmem>>, vector<4x4x16xf32>
    tpu.vector_store %arg4[%c0_6, %c0_7, %c0_8], %19 {strides = array<i32>} : memref<4x24x16xf32, #tpu.memory_space<vmem>>, vector<4x4x16xf32>,
    %21 = vector.extract_strided_slice %15 {offsets = [0, 15, 0], sizes = [4, 1, 16], strides = [1, 1, 1]} : vector<4x16x16xf32> to vector<4x1x16xf32>
    %22 = vector.shape_cast %21 : vector<4x1x16xf32> to vector<4x1x16xf32>
    %23 = vector.broadcast %22 : vector<4x1x16xf32> to vector<4x4x16xf32>
    %c0_9 = arith.constant 0 : index
    %c20 = arith.constant 20 : index
    %c0_10 = arith.constant 0 : index
    %24 = vector.load %arg4[%c0_9, %c20, %c0_10] : memref<4x24x16xf32, #tpu.memory_space<vmem>>, vector<4x4x16xf32>
    tpu.vector_store %arg4[%c0_9, %c20, %c0_10], %23 {strides = array<i32>} : memref<4x24x16xf32, #tpu.memory_space<vmem>>, vector<4x4x16xf32>,
    %c0_11 = arith.constant 0 : index
    %25 = arith.index_cast %6 : i32 to index
    %c0_12 = arith.constant 0 : index
    %26 = vector.load %arg4[%c0_11, %25, %c0_12] : memref<4x24x16xf32, #tpu.memory_space<vmem>>, vector<4x16x16xf32>
    %27 = vector.broadcast %12 : i32 to vector<16x16xi32>
    %28 = arith.addi %2, %27 : vector<16x16xi32>
    %c0_i32_13 = arith.constant 0 : i32
    %c15_i32 = arith.constant 15 : i32
    %29 = vector.broadcast %c0_i32_13 : i32 to vector<16x16xi32>
    %30 = arith.maxsi %29, %28 : vector<16x16xi32>
    %31 = vector.broadcast %c15_i32 : i32 to vector<16x16xi32>
    %32 = arith.minsi %31, %30 : vector<16x16xi32>
    %33 = arith.cmpi eq, %1, %32 : vector<16x16xi32>
    %34 = arith.extui %33 : vector<16x16xi1> to vector<16x16xi32>
    %35 = arith.sitofp %34 : vector<16x16xi32> to vector<16x16xf32>
    %36 = vector.shape_cast %26 : vector<4x16x16xf32> to vector<64x16xf32>
    %cst = arith.constant dense<0.000000e+00> : vector<64x16xf32>
    %37 = tpu.matmul %36, %35, %cst {dimension_numbers = #tpu.dot_dimension_numbers<[1], [0], [0], [1], [0, 0, 1, 1], [], []>} : vector<64x16xf32>, vector<16x16xf32>, vector<64x16xf32> -> vector<64x16xf32>
    %38 = vector.shape_cast %37 : vector<64x16xf32> to vector<4x16x16xf32>
    %39 = arith.index_cast %c0_i32 : i32 to index
    %c0_14 = arith.constant 0 : index
    %c0_15 = arith.constant 0 : index
    %c0_16 = arith.constant 0 : index
    %40 = vector.load %arg3[%39, %c0_14, %c0_15, %c0_16] : memref<4x4x16x16xf32, #tpu.memory_space<vmem>>, vector<1x4x16x16xf32>
    %41 = vector.shape_cast %40 : vector<1x4x16x16xf32> to vector<4x16x16xf32>
    %42 = vector.shape_cast %38 : vector<4x16x16xf32> to vector<1x4x16x16xf32>
    tpu.vector_store %arg3[%39, %c0_14, %c0_15, %c0_16], %42 {strides = array<i32>} : memref<4x4x16x16xf32, #tpu.memory_space<vmem>>, vector<1x4x16x16xf32>,
    %c1_i32_17 = arith.constant 1 : i32
    %43 = arith.addi %0, %c1_i32_17 : i32
    %c2_i32_18 = arith.constant 2 : i32
    %44 = arith.muli %c2_i32_18, %43 : i32
    %45 = arith.index_cast %44 : i32 to index
    %46 = memref.load %arg1[%45] : memref<16xi32, #tpu.memory_space<smem>>
    %47 = arith.addi %0, %c1_i32_17 : i32
    %c2_i32_19 = arith.constant 2 : i32
    %48 = arith.muli %c2_i32_19, %47 : i32
    %c1_i32_20 = arith.constant 1 : i32
    %49 = arith.addi %48, %c1_i32_20 : i32
    %50 = arith.index_cast %49 : i32 to index
    %51 = memref.load %arg1[%50] : memref<16xi32, #tpu.memory_space<smem>>
    %c4_i32_21 = arith.constant 4 : i32
    %52 = arith.subi %51, %c4_i32_21 : i32
    %53 = arith.index_cast %c1_i32_17 : i32 to index
    %c0_22 = arith.constant 0 : index
    %c0_23 = arith.constant 0 : index
    %c0_24 = arith.constant 0 : index
    %54 = vector.load %arg2[%53, %c0_22, %c0_23, %c0_24] : memref<4x4x16x16xf32, #tpu.memory_space<vmem>>, vector<1x4x16x16xf32>
    %55 = vector.shape_cast %54 : vector<1x4x16x16xf32> to vector<4x16x16xf32>
    %c0_25 = arith.constant 0 : index
    %c4_26 = arith.constant 4 : index
    %c0_27 = arith.constant 0 : index
    %56 = vector.load %arg4[%c0_25, %c4_26, %c0_27] : memref<4x24x16xf32, #tpu.memory_space<vmem>>, vector<4x16x16xf32>
    tpu.vector_store %arg4[%c0_25, %c4_26, %c0_27], %55 {strides = array<i32>} : memref<4x24x16xf32, #tpu.memory_space<vmem>>, vector<4x16x16xf32>,
    %57 = vector.extract_strided_slice %55 {offsets = [0, 0, 0], sizes = [4, 1, 16], strides = [1, 1, 1]} : vector<4x16x16xf32> to vector<4x1x16xf32>
    %58 = vector.shape_cast %57 : vector<4x1x16xf32> to vector<4x1x16xf32>
    %59 = vector.broadcast %58 : vector<4x1x16xf32> to vector<4x4x16xf32>
    %c0_28 = arith.constant 0 : index
    %c0_29 = arith.constant 0 : index
    %c0_30 = arith.constant 0 : index
    %60 = vector.load %arg4[%c0_28, %c0_29, %c0_30] : memref<4x24x16xf32, #tpu.memory_space<vmem>>, vector<4x4x16xf32>
    tpu.vector_store %arg4[%c0_28, %c0_29, %c0_30], %59 {strides = array<i32>} : memref<4x24x16xf32, #tpu.memory_space<vmem>>, vector<4x4x16xf32>,
    %61 = vector.extract_strided_slice %55 {offsets = [0, 15, 0], sizes = [4, 1, 16], strides = [1, 1, 1]} : vector<4x16x16xf32> to vector<4x1x16xf32>
    %62 = vector.shape_cast %61 : vector<4x1x16xf32> to vector<4x1x16xf32>
    %63 = vector.broadcast %62 : vector<4x1x16xf32> to vector<4x4x16xf32>
    %c0_31 = arith.constant 0 : index
    %c20_32 = arith.constant 20 : index
    %c0_33 = arith.constant 0 : index
    %64 = vector.load %arg4[%c0_31, %c20_32, %c0_33] : memref<4x24x16xf32, #tpu.memory_space<vmem>>, vector<4x4x16xf32>
    tpu.vector_store %arg4[%c0_31, %c20_32, %c0_33], %63 {strides = array<i32>} : memref<4x24x16xf32, #tpu.memory_space<vmem>>, vector<4x4x16xf32>,
    %c0_34 = arith.constant 0 : index
    %65 = arith.index_cast %46 : i32 to index
    %c0_35 = arith.constant 0 : index
    %66 = vector.load %arg4[%c0_34, %65, %c0_35] : memref<4x24x16xf32, #tpu.memory_space<vmem>>, vector<4x16x16xf32>
    %67 = vector.broadcast %52 : i32 to vector<16x16xi32>
    %68 = arith.addi %2, %67 : vector<16x16xi32>
    %c0_i32_36 = arith.constant 0 : i32
    %c15_i32_37 = arith.constant 15 : i32
    %69 = vector.broadcast %c0_i32_36 : i32 to vector<16x16xi32>
    %70 = arith.maxsi %69, %68 : vector<16x16xi32>
    %71 = vector.broadcast %c15_i32_37 : i32 to vector<16x16xi32>
    %72 = arith.minsi %71, %70 : vector<16x16xi32>
    %73 = arith.cmpi eq, %1, %72 : vector<16x16xi32>
    %74 = arith.extui %73 : vector<16x16xi1> to vector<16x16xi32>
    %75 = arith.sitofp %74 : vector<16x16xi32> to vector<16x16xf32>
    %76 = vector.shape_cast %66 : vector<4x16x16xf32> to vector<64x16xf32>
    %cst_38 = arith.constant dense<0.000000e+00> : vector<64x16xf32>
    %77 = tpu.matmul %76, %75, %cst_38 {dimension_numbers = #tpu.dot_dimension_numbers<[1], [0], [0], [1], [0, 0, 1, 1], [], []>} : vector<64x16xf32>, vector<16x16xf32>, vector<64x16xf32> -> vector<64x16xf32>
    %78 = vector.shape_cast %77 : vector<64x16xf32> to vector<4x16x16xf32>
    %79 = arith.index_cast %c1_i32_17 : i32 to index
    %c0_39 = arith.constant 0 : index
    %c0_40 = arith.constant 0 : index
    %c0_41 = arith.constant 0 : index
    %80 = vector.load %arg3[%79, %c0_39, %c0_40, %c0_41] : memref<4x4x16x16xf32, #tpu.memory_space<vmem>>, vector<1x4x16x16xf32>
    %81 = vector.shape_cast %80 : vector<1x4x16x16xf32> to vector<4x16x16xf32>
    %82 = vector.shape_cast %78 : vector<4x16x16xf32> to vector<1x4x16x16xf32>
    tpu.vector_store %arg3[%79, %c0_39, %c0_40, %c0_41], %82 {strides = array<i32>} : memref<4x4x16x16xf32, #tpu.memory_space<vmem>>, vector<1x4x16x16xf32>,
    %c2_i32_42 = arith.constant 2 : i32
    %83 = arith.addi %0, %c2_i32_42 : i32
    %c2_i32_43 = arith.constant 2 : i32
    %84 = arith.muli %c2_i32_43, %83 : i32
    %85 = arith.index_cast %84 : i32 to index
    %86 = memref.load %arg1[%85] : memref<16xi32, #tpu.memory_space<smem>>
    %87 = arith.addi %0, %c2_i32_42 : i32
    %c2_i32_44 = arith.constant 2 : i32
    %88 = arith.muli %c2_i32_44, %87 : i32
    %c1_i32_45 = arith.constant 1 : i32
    %89 = arith.addi %88, %c1_i32_45 : i32
    %90 = arith.index_cast %89 : i32 to index
    %91 = memref.load %arg1[%90] : memref<16xi32, #tpu.memory_space<smem>>
    %c4_i32_46 = arith.constant 4 : i32
    %92 = arith.subi %91, %c4_i32_46 : i32
    %93 = arith.index_cast %c2_i32_42 : i32 to index
    %c0_47 = arith.constant 0 : index
    %c0_48 = arith.constant 0 : index
    %c0_49 = arith.constant 0 : index
    %94 = vector.load %arg2[%93, %c0_47, %c0_48, %c0_49] : memref<4x4x16x16xf32, #tpu.memory_space<vmem>>, vector<1x4x16x16xf32>
    %95 = vector.shape_cast %94 : vector<1x4x16x16xf32> to vector<4x16x16xf32>
    %c0_50 = arith.constant 0 : index
    %c4_51 = arith.constant 4 : index
    %c0_52 = arith.constant 0 : index
    %96 = vector.load %arg4[%c0_50, %c4_51, %c0_52] : memref<4x24x16xf32, #tpu.memory_space<vmem>>, vector<4x16x16xf32>
    tpu.vector_store %arg4[%c0_50, %c4_51, %c0_52], %95 {strides = array<i32>} : memref<4x24x16xf32, #tpu.memory_space<vmem>>, vector<4x16x16xf32>,
    %97 = vector.extract_strided_slice %95 {offsets = [0, 0, 0], sizes = [4, 1, 16], strides = [1, 1, 1]} : vector<4x16x16xf32> to vector<4x1x16xf32>
    %98 = vector.shape_cast %97 : vector<4x1x16xf32> to vector<4x1x16xf32>
    %99 = vector.broadcast %98 : vector<4x1x16xf32> to vector<4x4x16xf32>
    %c0_53 = arith.constant 0 : index
    %c0_54 = arith.constant 0 : index
    %c0_55 = arith.constant 0 : index
    %100 = vector.load %arg4[%c0_53, %c0_54, %c0_55] : memref<4x24x16xf32, #tpu.memory_space<vmem>>, vector<4x4x16xf32>
    tpu.vector_store %arg4[%c0_53, %c0_54, %c0_55], %99 {strides = array<i32>} : memref<4x24x16xf32, #tpu.memory_space<vmem>>, vector<4x4x16xf32>,
    %101 = vector.extract_strided_slice %95 {offsets = [0, 15, 0], sizes = [4, 1, 16], strides = [1, 1, 1]} : vector<4x16x16xf32> to vector<4x1x16xf32>
    %102 = vector.shape_cast %101 : vector<4x1x16xf32> to vector<4x1x16xf32>
    %103 = vector.broadcast %102 : vector<4x1x16xf32> to vector<4x4x16xf32>
    %c0_56 = arith.constant 0 : index
    %c20_57 = arith.constant 20 : index
    %c0_58 = arith.constant 0 : index
    %104 = vector.load %arg4[%c0_56, %c20_57, %c0_58] : memref<4x24x16xf32, #tpu.memory_space<vmem>>, vector<4x4x16xf32>
    tpu.vector_store %arg4[%c0_56, %c20_57, %c0_58], %103 {strides = array<i32>} : memref<4x24x16xf32, #tpu.memory_space<vmem>>, vector<4x4x16xf32>,
    %c0_59 = arith.constant 0 : index
    %105 = arith.index_cast %86 : i32 to index
    %c0_60 = arith.constant 0 : index
    %106 = vector.load %arg4[%c0_59, %105, %c0_60] : memref<4x24x16xf32, #tpu.memory_space<vmem>>, vector<4x16x16xf32>
    %107 = vector.broadcast %92 : i32 to vector<16x16xi32>
    %108 = arith.addi %2, %107 : vector<16x16xi32>
    %c0_i32_61 = arith.constant 0 : i32
    %c15_i32_62 = arith.constant 15 : i32
    %109 = vector.broadcast %c0_i32_61 : i32 to vector<16x16xi32>
    %110 = arith.maxsi %109, %108 : vector<16x16xi32>
    %111 = vector.broadcast %c15_i32_62 : i32 to vector<16x16xi32>
    %112 = arith.minsi %111, %110 : vector<16x16xi32>
    %113 = arith.cmpi eq, %1, %112 : vector<16x16xi32>
    %114 = arith.extui %113 : vector<16x16xi1> to vector<16x16xi32>
    %115 = arith.sitofp %114 : vector<16x16xi32> to vector<16x16xf32>
    %116 = vector.shape_cast %106 : vector<4x16x16xf32> to vector<64x16xf32>
    %cst_63 = arith.constant dense<0.000000e+00> : vector<64x16xf32>
    %117 = tpu.matmul %116, %115, %cst_63 {dimension_numbers = #tpu.dot_dimension_numbers<[1], [0], [0], [1], [0, 0, 1, 1], [], []>} : vector<64x16xf32>, vector<16x16xf32>, vector<64x16xf32> -> vector<64x16xf32>
    %118 = vector.shape_cast %117 : vector<64x16xf32> to vector<4x16x16xf32>
    %119 = arith.index_cast %c2_i32_42 : i32 to index
    %c0_64 = arith.constant 0 : index
    %c0_65 = arith.constant 0 : index
    %c0_66 = arith.constant 0 : index
    %120 = vector.load %arg3[%119, %c0_64, %c0_65, %c0_66] : memref<4x4x16x16xf32, #tpu.memory_space<vmem>>, vector<1x4x16x16xf32>
    %121 = vector.shape_cast %120 : vector<1x4x16x16xf32> to vector<4x16x16xf32>
    %122 = vector.shape_cast %118 : vector<4x16x16xf32> to vector<1x4x16x16xf32>
    tpu.vector_store %arg3[%119, %c0_64, %c0_65, %c0_66], %122 {strides = array<i32>} : memref<4x4x16x16xf32, #tpu.memory_space<vmem>>, vector<1x4x16x16xf32>,
    %c3_i32 = arith.constant 3 : i32
    %123 = arith.addi %0, %c3_i32 : i32
    %c2_i32_67 = arith.constant 2 : i32
    %124 = arith.muli %c2_i32_67, %123 : i32
    %125 = arith.index_cast %124 : i32 to index
    %126 = memref.load %arg1[%125] : memref<16xi32, #tpu.memory_space<smem>>
    %127 = arith.addi %0, %c3_i32 : i32
    %c2_i32_68 = arith.constant 2 : i32
    %128 = arith.muli %c2_i32_68, %127 : i32
    %c1_i32_69 = arith.constant 1 : i32
    %129 = arith.addi %128, %c1_i32_69 : i32
    %130 = arith.index_cast %129 : i32 to index
    %131 = memref.load %arg1[%130] : memref<16xi32, #tpu.memory_space<smem>>
    %c4_i32_70 = arith.constant 4 : i32
    %132 = arith.subi %131, %c4_i32_70 : i32
    %133 = arith.index_cast %c3_i32 : i32 to index
    %c0_71 = arith.constant 0 : index
    %c0_72 = arith.constant 0 : index
    %c0_73 = arith.constant 0 : index
    %134 = vector.load %arg2[%133, %c0_71, %c0_72, %c0_73] : memref<4x4x16x16xf32, #tpu.memory_space<vmem>>, vector<1x4x16x16xf32>
    %135 = vector.shape_cast %134 : vector<1x4x16x16xf32> to vector<4x16x16xf32>
    %c0_74 = arith.constant 0 : index
    %c4_75 = arith.constant 4 : index
    %c0_76 = arith.constant 0 : index
    %136 = vector.load %arg4[%c0_74, %c4_75, %c0_76] : memref<4x24x16xf32, #tpu.memory_space<vmem>>, vector<4x16x16xf32>
    tpu.vector_store %arg4[%c0_74, %c4_75, %c0_76], %135 {strides = array<i32>} : memref<4x24x16xf32, #tpu.memory_space<vmem>>, vector<4x16x16xf32>,
    %137 = vector.extract_strided_slice %135 {offsets = [0, 0, 0], sizes = [4, 1, 16], strides = [1, 1, 1]} : vector<4x16x16xf32> to vector<4x1x16xf32>
    %138 = vector.shape_cast %137 : vector<4x1x16xf32> to vector<4x1x16xf32>
    %139 = vector.broadcast %138 : vector<4x1x16xf32> to vector<4x4x16xf32>
    %c0_77 = arith.constant 0 : index
    %c0_78 = arith.constant 0 : index
    %c0_79 = arith.constant 0 : index
    %140 = vector.load %arg4[%c0_77, %c0_78, %c0_79] : memref<4x24x16xf32, #tpu.memory_space<vmem>>, vector<4x4x16xf32>
    tpu.vector_store %arg4[%c0_77, %c0_78, %c0_79], %139 {strides = array<i32>} : memref<4x24x16xf32, #tpu.memory_space<vmem>>, vector<4x4x16xf32>,
    %141 = vector.extract_strided_slice %135 {offsets = [0, 15, 0], sizes = [4, 1, 16], strides = [1, 1, 1]} : vector<4x16x16xf32> to vector<4x1x16xf32>
    %142 = vector.shape_cast %141 : vector<4x1x16xf32> to vector<4x1x16xf32>
    %143 = vector.broadcast %142 : vector<4x1x16xf32> to vector<4x4x16xf32>
    %c0_80 = arith.constant 0 : index
    %c20_81 = arith.constant 20 : index
    %c0_82 = arith.constant 0 : index
    %144 = vector.load %arg4[%c0_80, %c20_81, %c0_82] : memref<4x24x16xf32, #tpu.memory_space<vmem>>, vector<4x4x16xf32>
    tpu.vector_store %arg4[%c0_80, %c20_81, %c0_82], %143 {strides = array<i32>} : memref<4x24x16xf32, #tpu.memory_space<vmem>>, vector<4x4x16xf32>,
    %c0_83 = arith.constant 0 : index
    %145 = arith.index_cast %126 : i32 to index
    %c0_84 = arith.constant 0 : index
    %146 = vector.load %arg4[%c0_83, %145, %c0_84] : memref<4x24x16xf32, #tpu.memory_space<vmem>>, vector<4x16x16xf32>
    %147 = vector.broadcast %132 : i32 to vector<16x16xi32>
    %148 = arith.addi %2, %147 : vector<16x16xi32>
    %c0_i32_85 = arith.constant 0 : i32
    %c15_i32_86 = arith.constant 15 : i32
    %149 = vector.broadcast %c0_i32_85 : i32 to vector<16x16xi32>
    %150 = arith.maxsi %149, %148 : vector<16x16xi32>
    %151 = vector.broadcast %c15_i32_86 : i32 to vector<16x16xi32>
    %152 = arith.minsi %151, %150 : vector<16x16xi32>
    %153 = arith.cmpi eq, %1, %152 : vector<16x16xi32>
    %154 = arith.extui %153 : vector<16x16xi1> to vector<16x16xi32>
    %155 = arith.sitofp %154 : vector<16x16xi32> to vector<16x16xf32>
    %156 = vector.shape_cast %146 : vector<4x16x16xf32> to vector<64x16xf32>
    %cst_87 = arith.constant dense<0.000000e+00> : vector<64x16xf32>
    %157 = tpu.matmul %156, %155, %cst_87 {dimension_numbers = #tpu.dot_dimension_numbers<[1], [0], [0], [1], [0, 0, 1, 1], [], []>} : vector<64x16xf32>, vector<16x16xf32>, vector<64x16xf32> -> vector<64x16xf32>
    %158 = vector.shape_cast %157 : vector<64x16xf32> to vector<4x16x16xf32>
    %159 = arith.index_cast %c3_i32 : i32 to index
    %c0_88 = arith.constant 0 : index
    %c0_89 = arith.constant 0 : index
    %c0_90 = arith.constant 0 : index
    %160 = vector.load %arg3[%159, %c0_88, %c0_89, %c0_90] : memref<4x4x16x16xf32, #tpu.memory_space<vmem>>, vector<1x4x16x16xf32>
    %161 = vector.shape_cast %160 : vector<1x4x16x16xf32> to vector<4x16x16xf32>
    %162 = vector.shape_cast %158 : vector<4x16x16xf32> to vector<1x4x16x16xf32>
    tpu.vector_store %arg3[%159, %c0_88, %c0_89, %c0_90], %162 {strides = array<i32>} : memref<4x4x16x16xf32, #tpu.memory_space<vmem>>, vector<1x4x16x16xf32>,
    %c4_i32_91 = arith.constant 4 : i32
    return
  }
  func.func @transform_0(%arg0: i32, %arg1: memref<16xi32, #tpu.memory_space<smem>>) -> (i32, i32, i32, i32) {
    %c0_i32 = arith.constant 0 : i32
    %c0_i32_0 = arith.constant 0 : i32
    %c0_i32_1 = arith.constant 0 : i32
    %c0_i32_2 = arith.constant 0 : i32
    return %arg0, %c0_i32, %c0_i32_0, %c0_i32_1 : i32, i32, i32, i32
  }
  func.func @transform_1(%arg0: i32, %arg1: memref<16xi32, #tpu.memory_space<smem>>) -> (i32, i32, i32, i32) {
    %c0_i32 = arith.constant 0 : i32
    %c0_i32_0 = arith.constant 0 : i32
    %c0_i32_1 = arith.constant 0 : i32
    %c0_i32_2 = arith.constant 0 : i32
    return %arg0, %c0_i32, %c0_i32_0, %c0_i32_1 : i32, i32, i32, i32
  }
}

</mosaic_0001>

<llo_original>
// kernel: tpu_custom_call.1
$region0: #{tpu_custom_call.1}
  #allocation0 [shape = 'u32[]', space=smem, size = 0x4, offset = 0x4, fixed_abs, tag = 'smem constant byte address 0x4 - core index']
  #allocation1 [shape = 'u32[72,128]{1,0:T(1,128)}', space=vmem, size = 0x9000, scoped, tag = 'internal scratch']
  #allocation2 [shape = 'f32[4,24,16]{2,1,0:T(8,128)}', space=vmem, size = 0xc000, scoped, tag = 'scratch operand']
  #allocation3 [shape = 's32[1]{0}', space=sflag, size = 0x4, scoped, tag = 'scoped memory for tpu_custom_call.1']
  #allocation4 [shape = 'u8[512]{0}', space=smem, size = 0x200, scoped, tag = 'prefetched SMEM operand 0']
  %s0 = inlined_call_operand.hbm [shape: s32[16], index: 0, kind: input, shape index: {}]
  %s1 = inlined_call_operand.hbm [shape: f32[8,4,16,16], index: 1, kind: input, shape index: {}]
  %s2 = inlined_call_operand.hbm [shape: f32[8,4,16,16], index: 2, kind: output, shape index: {}]
  %s3 = sld [smem:[#allocation0]]
  $region41: #{tpu_custom_call.1} parent=0
    _
  %s5 = ssub.s32 1, %s3
  %s6 = scalar_select 0, %s5, %s3
  %s8 = sshll.u32 %s0, 4
  %s9 = int_to_ptr.hbm [resolvable:$true] %s8
  %11 = dma.hbm_to_smem %s9, 16, [#allocation4], [#allocation3]
  %13 = dma.done [#allocation3], 16
  %14 = sfence
  $region1: #{tpu_custom_call.1} parent=0
    #allocation5 [shape = 'u8[262144]{0}', space=vmem, size = 0x40000, scoped, tag = 'input window, operand 1']
    #allocation6 [shape = 's32[2]{0}', space=sflag, size = 0x8, scoped, tag = 'scoped memory for tpu_custom_call.1']
    #allocation7 [shape = 's32[2]{0}', space=sflag, size = 0x8, scoped, tag = 'scoped memory for tpu_custom_call.1']
    #allocation8 [shape = 'u8[262144]{0}', space=vmem, size = 0x40000, scoped, tag = 'output window, operand 0']
    %15 = vsyncpa [#allocation6], 0
    %s16 = scalar_lea.sflag [#allocation6], 1
    %17 = vsyncpa %s16, 0
    %18 = vsyncpa [#allocation7], 0
    %s19 = scalar_lea.sflag [#allocation7], 1
    %20 = vsyncpa %s19, 0
    loop: start=0, step=1, limit=4
    $region2: #{tpu_custom_call.1} parent=1 // loop_pre_header
      _
    $region3: #{tpu_custom_call.1} parent=1 // loop_header
      %s22 = sphi 0, %s26
      %p23 = scmp.ge.s32.totalorder %s22, 4
      %s32 = sphi 0, %s34
      %s35 = sphi 0, %s32
      %s36 = sphi 0, %s35
      %s52 = sphi 0, %s36
      %s58 = sphi 0, %s60
      %s61 = sphi 0, %s58
      %s62 = sphi 0, %s61
      %s78 = sphi 0, %s62
    $region4: #{tpu_custom_call.1} parent=1 // loop_header_branch
      %25 = sbr.rel (%p23) target = $region8
    $region5: #{tpu_custom_call.1} parent=1 // loop_body
      %s27 = ssub.s32 %s22, 1
      %s28 = ssub.s32 %s22, 2
      %s29 = sadd.s32 %s22, 1
      %s30 = ssub.s32 %s22, %s29
      %p31 = scmp.eq.s32.totalorder %s30, 0
      %s33 = sadd.s32 %s32, 1
      %s34 = scalar_select %p31, %s32, %s33
      %p37 = pneg %p31
      %p38 = scmp.eq.s32.totalorder %s22, 1
      %p39 = por %p37, %p38
      %p40 = scmp.ne.s32.totalorder %s32, %s35
      %p41 = scmp.eq.s32.totalorder %s22, 0
      %p42 = por %p40, %p41
      %p43 = scmp.ne.s32.totalorder %s32, %s35
      %p44 = scmp.eq.s32.totalorder %s27, 1
      %p45 = por %p43, %p44
      %p46 = scmp.ne.s32.totalorder %s35, %s36
      %p47 = scmp.eq.s32.totalorder %s27, 0
      %p48 = por %p46, %p47
      %p49 = scmp.ne.s32.totalorder %s35, %s36
      %p50 = scmp.eq.s32.totalorder %s28, 1
      %p51 = por %p49, %p50
      %p53 = scmp.ne.s32.totalorder %s36, %s52
      %p54 = scmp.eq.s32.totalorder %s28, 0
      %p55 = por %p53, %p54
      %s56 = ssub.s32 %s22, %s29
      %p57 = scmp.eq.s32.totalorder %s56, 0
      %s59 = sadd.s32 %s58, 1
      %s60 = scalar_select %p57, %s58, %s59
      %p63 = pneg %p57
      %p64 = scmp.eq.s32.totalorder %s22, 1
      %p65 = por %p63, %p64
      %p66 = scmp.ne.s32.totalorder %s58, %s61
      %p67 = scmp.eq.s32.totalorder %s22, 0
      %p68 = por %p66, %p67
      %p69 = scmp.ne.s32.totalorder %s58, %s61
      %p70 = scmp.eq.s32.totalorder %s27, 1
      %p71 = por %p69, %p70
      %p72 = scmp.ne.s32.totalorder %s61, %s62
      %p73 = scmp.eq.s32.totalorder %s27, 0
      %p74 = por %p72, %p73
      %p75 = scmp.ne.s32.totalorder %s61, %s62
      %p76 = scmp.eq.s32.totalorder %s28, 1
      %p77 = por %p75, %p76
      %p79 = scmp.ne.s32.totalorder %s62, %s78
      %p80 = scmp.eq.s32.totalorder %s28, 0
      %p81 = por %p79, %p80
      %p82 = scmp.le.s32.totalorder 1, %s22
      %p83 = scmp.lt.s32.totalorder %s22, 3
      %p84 = pnand %p82, %p83
      %p85 = pneg %p84
      // Predicated region
      $region9: #{tpu_custom_call.1} parent=5 // pred_check
        _
      $region10: #{tpu_custom_call.1} parent=5 // pred_check_branch
        %87 = sbr.rel (%p84) target = $region12
      $region11: #{tpu_custom_call.1} parent=5 // pred_region
        %s88 = ssub.s32 %s22, 1
      $region12: #{tpu_custom_call.1} parent=5 // pred_fallthru
        _
      %p89 = scmp.lt.s32.totalorder %s22, 2
      // Predicated region
      $region13: #{tpu_custom_call.1} parent=5 // pred_check
        %p90 = pneg %p89
      $region14: #{tpu_custom_call.1} parent=5 // pred_check_branch
        %92 = sbr.rel (%p90) target = $region16
      $region15: #{tpu_custom_call.1} parent=5 // pred_region
        // Predicated region
        $region17: #{tpu_custom_call.1} parent=15 // pred_check
          %p93 = pneg %p42
        $region18: #{tpu_custom_call.1} parent=15 // pred_check_branch
          %95 = sbr.rel (%p93) target = $region20
        $region19: #{tpu_custom_call.1} parent=15 // pred_region
          %s96 = sand.u32 %s32, 1
          %s97 = scalar_lea.sflag [#allocation6], %s96
          %s98 = sand.u32 %s32, 1
          %s99 = smul.addr %s98, 256
          %s100 = scalar_lea.vmem [#allocation5], %s99
          %s101 = smul.u32 4, %s22
          %103 = vsyncadd %s97, 0
          %s104 = smul.addr %s101, 8
          %s105 = smul.addr %s104, 8
          %s106 = scalar_lea.hbm %s1, %s105
          %s107 = sshll.u32 %s106, 4
          %s108 = int_to_ptr.hbm [resolvable:$true] %s107
          %s109 = sshll.u32 %s100, 4
          %s110 = int_to_ptr.vmem [resolvable:$true] %s109
          %115 = dma.hbm_to_vmem [thread:$0]  %s108, 4096, %s110, %s97, 128, 128, 8
        $region20: #{tpu_custom_call.1} parent=15 // pred_fallthru
          _
      $region16: #{tpu_custom_call.1} parent=5 // pred_fallthru
        _
      %p116 = scmp.le.s32.totalorder 1, %s22
      %p117 = scmp.lt.s32.totalorder %s22, 3
      %p118 = pnand %p116, %p117
      %p119 = pneg %p118
      // Predicated region
      $region21: #{tpu_custom_call.1} parent=5 // pred_check
        _
      $region22: #{tpu_custom_call.1} parent=5 // pred_check_branch
        %121 = sbr.rel (%p118) target = $region24
      $region23: #{tpu_custom_call.1} parent=5 // pred_region
        %s122 = ssub.s32 %s22, 1
        %s123 = sand.u32 %s35, 1
        %s124 = scalar_lea.sflag [#allocation6], %s123
        %s125 = sand.u32 %s35, 1
        %s126 = smul.addr %s125, 256
        %s127 = scalar_lea.vmem [#allocation5], %s126
        // Predicated region
        $region25: #{tpu_custom_call.1} parent=23 // pred_check
          %p128 = pneg %p48
        $region26: #{tpu_custom_call.1} parent=23 // pred_check_branch
          %130 = sbr.rel (%p128) target = $region28
        $region27: #{tpu_custom_call.1} parent=23 // pred_region
          %132 = dma.done %s124, 4096
        $region28: #{tpu_custom_call.1} parent=23 // pred_fallthru
          _
        %s133 = sand.u32 %s35, 1
        %s134 = scalar_lea.sflag [#allocation6], %s133
        %s135 = sand.u32 %s35, 1
        %s136 = smul.addr %s135, 256
        %s137 = scalar_lea.vmem [#allocation5], %s136
        %p138 = pneg %p48
        %p139 = pneg %p45
        %p140 = pneg %p74
        %p141 = pneg %p71
        %s142 = sand.u32 %s61, 1
        %s143 = scalar_lea.sflag [#allocation7], %s142
        %s144 = sand.u32 %s61, 1
        %s145 = smul.addr %s144, 256
        %s146 = scalar_lea.vmem [#allocation8], %s145
        %s147 = smul.u32 4, %s27
        %s148 = smul.u32 4, %s27
        %s149 = smul.u32 %s27, 4
        %v150 = vlaneseq
        %v151 = vshrl.u32 %v150, 7
        %v152 = vadd.s32 %v151, 8
        %v153 = vlaneseq
        %v154 = vand.u32 %v153, 127
        %s155 = smul.u32 %s27, 8
        %s156 = sld [smem:[#allocation4 + %s155]]
        %s157 = sadd.s32 %s155, 1
        %s158 = sld [smem:[#allocation4 + %s157]]
        %s159 = ssub.s32 %s158, 4
        %v160 = vld [vmem:[%s127] sm:$0xff]
        %v161 = vld [vmem:[%s127 + $0x8] sm:$0xff]
        %v162 = vld [vmem:[%s127 + $0x10] sm:$0xff]
        %v163 = vld [vmem:[%s127 + $0x18] sm:$0xff]
        %v164 = vld [vmem:[%s127 + $0x20] sm:$0xff]
        %v165 = vld [vmem:[%s127 + $0x28] sm:$0xff]
        %v166 = vld [vmem:[%s127 + $0x30] sm:$0xff]
        %v167 = vld [vmem:[%s127 + $0x38] sm:$0xff]
        %vm168 = vcmask 130048
        %169 = vst.msk [vmem:[#allocation2 + $0x4] sm:$0xff] %vm168, %v160
        %170 = vst.msk [vmem:[#allocation2 + $0xc] sm:$0xff] %vm168, %v161
        %171 = vst.msk [vmem:[#allocation2 + $0x1c] sm:$0xff] %vm168, %v162
        %172 = vst.msk [vmem:[#allocation2 + $0x24] sm:$0xff] %vm168, %v163
        %173 = vst.msk [vmem:[#allocation2 + $0x34] sm:$0xff] %vm168, %v164
        %174 = vst.msk [vmem:[#allocation2 + $0x3c] sm:$0xff] %vm168, %v165
        %175 = vst.msk [vmem:[#allocation2 + $0x4c] sm:$0xff] %vm168, %v166
        %176 = vst.msk [vmem:[#allocation2 + $0x54] sm:$0xff] %vm168, %v167
        %v177 = vperm.slane %v160, 0
        %v178 = vperm.slane %v162, 0
        %v179 = vperm.slane %v164, 0
        %v180 = vperm.slane %v166, 0
        %vm181 = vcmask 125952
        %182 = vst.msk [vmem:[#allocation2] sm:$0xf] %vm181, %v177
        %183 = vst.msk [vmem:[#allocation2 + $0x18] sm:$0xf] %vm181, %v178
        %184 = vst.msk [vmem:[#allocation2 + $0x30] sm:$0xf] %vm181, %v179
        %185 = vst.msk [vmem:[#allocation2 + $0x48] sm:$0xf] %vm181, %v180
        %v186 = vperm.slane %v161, 7
        %v187 = vperm.slane %v163, 7
        %v188 = vperm.slane %v165, 7
        %v189 = vperm.slane %v167, 7
        %190 = vst.msk [vmem:[#allocation2 + $0x14] sm:$0xf] %vm181, %v186
        %191 = vst.msk [vmem:[#allocation2 + $0x2c] sm:$0xf] %vm181, %v187
        %192 = vst.msk [vmem:[#allocation2 + $0x44] sm:$0xf] %vm181, %v188
        %193 = vst.msk [vmem:[#allocation2 + $0x5c] sm:$0xf] %vm181, %v189
        %s194 = scalar_lea.vmem [#allocation2], %s156
        %v195 = vld [vmem:[%s194] sm:$0xff]
        %v196 = vld [vmem:[%s194 + $0x8] sm:$0xff]
        %v197 = vld [vmem:[%s194 + $0x18] sm:$0xff]
        %v198 = vld [vmem:[%s194 + $0x20] sm:$0xff]
        %v199 = vld [vmem:[%s194 + $0x30] sm:$0xff]
        %v200 = vld [vmem:[%s194 + $0x38] sm:$0xff]
        %v201 = vld [vmem:[%s194 + $0x48] sm:$0xff]
        %v202 = vld [vmem:[%s194 + $0x50] sm:$0xff]
        %v203 = vstv %s159
        %v204 = vadd.s32 %v154, %v203
        %vm205 = vcmp.gt.s32.totalorder %v204, 0
        %v206 = vsel %vm205, %v204, 0
        %vm207 = vcmp.lt.s32.totalorder %v206, 15
        %v208 = vsel %vm207, %v206, 15
        %vm209 = vcmp.eq.s32.totalorder %v151, %v208
        %vm210 = vcmp.eq.s32.totalorder %v152, %v208
        %v211 = vsel %vm209, 1, 0
        %v212 = vsel %vm210, 1, 0
        %v213 = vcvt.s32.f32 %v211
        %v214 = vcvt.s32.f32 %v212
        %v216 = vsel %vm168, %v195, 0
        %v219 = vsel %vm168, %v196, 0
        %v222 = vsel %vm168, %v197, 0
        %v225 = vsel %vm168, %v198, 0
        %v228 = vsel %vm168, %v199, 0
        %v231 = vsel %vm168, %v200, 0
        %v234 = vsel %vm168, %v201, 0
        %v237 = vsel %vm168, %v202, 0
        %239 = vmatpush.msra.mxu0 0.0
        %240 = vmatpush.msra.mxu0 0.0
        %241 = vmatpush.msra.mxu0 0.0
        %242 = vmatpush.msra.mxu0 0.0
        %243 = vmatpush.msra.mxu0 0.0
        %244 = vmatpush.msra.mxu0 0.0
        %245 = vmatpush.msra.mxu0 0.0
        %246 = vmatpush.msra.mxu0 0.0
        %247 = vmatpush.msra.mxu0 0.0
        %248 = vmatpush.msra.mxu0 0.0
        %249 = vmatpush.msra.mxu0 0.0
        %250 = vmatpush.msra.mxu0 0.0
        %251 = vmatpush.msra.mxu0 0.0
        %252 = vmatpush.msra.mxu0 0.0
        %253 = vmatpush.msra.mxu0 %v214
        %254 = vmatpush.msra.mxu0 %v213
        %255 = vmatmul.f32.gmra.mxu0 %v216
        %v256 = vpop.f32.mrf.mxu0
        %v257 = vadd.f32 0.0, %v256
        %258 = vmatmul.f32.gmra.mxu0 %v219
        %v259 = vpop.f32.mrf.mxu0
        %v260 = vadd.f32 0.0, %v259
        %261 = vmatmul.f32.gmra.mxu0 %v222
        %v262 = vpop.f32.mrf.mxu0
        %v263 = vadd.f32 0.0, %v262
        %264 = vmatmul.f32.gmra.mxu0 %v225
        %v265 = vpop.f32.mrf.mxu0
        %v266 = vadd.f32 0.0, %v265
        %267 = vmatmul.f32.gmra.mxu0 %v228
        %v268 = vpop.f32.mrf.mxu0
        %v269 = vadd.f32 0.0, %v268
        %270 = vmatmul.f32.gmra.mxu0 %v231
        %v271 = vpop.f32.mrf.mxu0
        %v272 = vadd.f32 0.0, %v271
        %273 = vmatmul.f32.gmra.mxu0 %v234
        %v274 = vpop.f32.mrf.mxu0
        %v275 = vadd.f32 0.0, %v274
        %276 = vmatmul.f32.gmra.mxu0 %v237
        %v277 = vpop.f32.mrf.mxu0
        %v278 = vadd.f32 0.0, %v277
        %279 = vdwg.mxu0
        %280 = vst.msk [vmem:[%s146] sm:$0xff] %vm168, %v257
        %281 = vst.msk [vmem:[%s146 + $0x8] sm:$0xff] %vm168, %v260
        %282 = vst.msk [vmem:[%s146 + $0x10] sm:$0xff] %vm168, %v263
        %283 = vst.msk [vmem:[%s146 + $0x18] sm:$0xff] %vm168, %v266
        %284 = vst.msk [vmem:[%s146 + $0x20] sm:$0xff] %vm168, %v269
        %285 = vst.msk [vmem:[%s146 + $0x28] sm:$0xff] %vm168, %v272
        %286 = vst.msk [vmem:[%s146 + $0x30] sm:$0xff] %vm168, %v275
        %287 = vst.msk [vmem:[%s146 + $0x38] sm:$0xff] %vm168, %v278
        %s288 = sadd.s32 %s149, 1
        %s289 = smul.u32 %s288, 2
        %s290 = sld [smem:[#allocation4 + %s289]]
        %s291 = sadd.s32 %s289, 1
        %s292 = sld [smem:[#allocation4 + %s291]]
        %s293 = ssub.s32 %s292, 4
        %s294 = scalar_lea.vmem %s127, 64 [#allocation5]
        %v295 = vld [vmem:[%s294] sm:$0xff]
        %v296 = vld [vmem:[%s294 + $0x8] sm:$0xff]
        %v297 = vld [vmem:[%s294 + $0x10] sm:$0xff]
        %v298 = vld [vmem:[%s294 + $0x18] sm:$0xff]
        %v299 = vld [vmem:[%s294 + $0x20] sm:$0xff]
        %v300 = vld [vmem:[%s294 + $0x28] sm:$0xff]
        %v301 = vld [vmem:[%s294 + $0x30] sm:$0xff]
        %v302 = vld [vmem:[%s294 + $0x38] sm:$0xff]
        %303 = vst.msk [vmem:[#allocation2 + $0x4] sm:$0xff] %vm168, %v295
        %304 = vst.msk [vmem:[#allocation2 + $0xc] sm:$0xff] %vm168, %v296
        %305 = vst.msk [vmem:[#allocation2 + $0x1c] sm:$0xff] %vm168, %v297
        %306 = vst.msk [vmem:[#allocation2 + $0x24] sm:$0xff] %vm168, %v298
        %307 = vst.msk [vmem:[#allocation2 + $0x34] sm:$0xff] %vm168, %v299
        %308 = vst.msk [vmem:[#allocation2 + $0x3c] sm:$0xff] %vm168, %v300
        %309 = vst.msk [vmem:[#allocation2 + $0x4c] sm:$0xff] %vm168, %v301
        %310 = vst.msk [vmem:[#allocation2 + $0x54] sm:$0xff] %vm168, %v302
        %v311 = vperm.slane %v295, 0
        %v312 = vperm.slane %v297, 0
        %v313 = vperm.slane %v299, 0
        %v314 = vperm.slane %v301, 0
        %315 = vst.msk [vmem:[#allocation2] sm:$0xf] %vm181, %v311
        %316 = vst.msk [vmem:[#allocation2 + $0x18] sm:$0xf] %vm181, %v312
        %317 = vst.msk [vmem:[#allocation2 + $0x30] sm:$0xf] %vm181, %v313
        %318 = vst.msk [vmem:[#allocation2 + $0x48] sm:$0xf] %vm181, %v314
        %v319 = vperm.slane %v296, 7
        %v320 = vperm.slane %v298, 7
        %v321 = vperm.slane %v300, 7
        %v322 = vperm.slane %v302, 7
        %323 = vst.msk [vmem:[#allocation2 + $0x14] sm:$0xf] %vm181, %v319
        %324 = vst.msk [vmem:[#allocation2 + $0x2c] sm:$0xf] %vm181, %v320
        %325 = vst.msk [vmem:[#allocation2 + $0x44] sm:$0xf] %vm181, %v321
        %326 = vst.msk [vmem:[#allocation2 + $0x5c] sm:$0xf] %vm181, %v322
        %s327 = scalar_lea.vmem [#allocation2], %s290
        %v328 = vld [vmem:[%s327] sm:$0xff]
        %v329 = vld [vmem:[%s327 + $0x8] sm:$0xff]
        %v330 = vld [vmem:[%s327 + $0x18] sm:$0xff]
        %v331 = vld [vmem:[%s327 + $0x20] sm:$0xff]
        %v332 = vld [vmem:[%s327 + $0x30] sm:$0xff]
        %v333 = vld [vmem:[%s327 + $0x38] sm:$0xff]
        %v334 = vld [vmem:[%s327 + $0x48] sm:$0xff]
        %v335 = vld [vmem:[%s327 + $0x50] sm:$0xff]
        %v336 = vstv %s293
        %v337 = vadd.s32 %v154, %v336
        %vm338 = vcmp.gt.s32.totalorder %v337, 0
        %v339 = vsel %vm338, %v337, 0
        %vm340 = vcmp.lt.s32.totalorder %v339, 15
        %v341 = vsel %vm340, %v339, 15
        %vm342 = vcmp.eq.s32.totalorder %v151, %v341
        %vm343 = vcmp.eq.s32.totalorder %v152, %v341
        %v344 = vsel %vm342, 1, 0
        %v345 = vsel %vm343, 1, 0
        %v346 = vcvt.s32.f32 %v344
        %v347 = vcvt.s32.f32 %v345
        %v349 = vsel %vm168, %v328, 0
        %v352 = vsel %vm168, %v329, 0
        %v355 = vsel %vm168, %v330, 0
        %v358 = vsel %vm168, %v331, 0
        %v361 = vsel %vm168, %v332, 0
        %v364 = vsel %vm168, %v333, 0
        %v367 = vsel %vm168, %v334, 0
        %v370 = vsel %vm168, %v335, 0
        %372 = vmatpush.msra.mxu0 0.0
        %373 = vmatpush.msra.mxu0 0.0
        %374 = vmatpush.msra.mxu0 0.0
        %375 = vmatpush.msra.mxu0 0.0
        %376 = vmatpush.msra.mxu0 0.0
        %377 = vmatpush.msra.mxu0 0.0
        %378 = vmatpush.msra.mxu0 0.0
        %379 = vmatpush.msra.mxu0 0.0
        %380 = vmatpush.msra.mxu0 0.0
        %381 = vmatpush.msra.mxu0 0.0
        %382 = vmatpush.msra.mxu0 0.0
        %383 = vmatpush.msra.mxu0 0.0
        %384 = vmatpush.msra.mxu0 0.0
        %385 = vmatpush.msra.mxu0 0.0
        %386 = vmatpush.msra.mxu0 %v347
        %387 = vmatpush.msra.mxu0 %v346
        %388 = vmatmul.f32.gmra.mxu0 %v349
        %v389 = vpop.f32.mrf.mxu0
        %v390 = vadd.f32 0.0, %v389
        %391 = vmatmul.f32.gmra.mxu0 %v352
        %v392 = vpop.f32.mrf.mxu0
        %v393 = vadd.f32 0.0, %v392
        %394 = vmatmul.f32.gmra.mxu0 %v355
        %v395 = vpop.f32.mrf.mxu0
        %v396 = vadd.f32 0.0, %v395
        %397 = vmatmul.f32.gmra.mxu0 %v358
        %v398 = vpop.f32.mrf.mxu0
        %v399 = vadd.f32 0.0, %v398
        %400 = vmatmul.f32.gmra.mxu0 %v361
        %v401 = vpop.f32.mrf.mxu0
        %v402 = vadd.f32 0.0, %v401
        %403 = vmatmul.f32.gmra.mxu0 %v364
        %v404 = vpop.f32.mrf.mxu0
        %v405 = vadd.f32 0.0, %v404
        %406 = vmatmul.f32.gmra.mxu0 %v367
        %v407 = vpop.f32.mrf.mxu0
        %v408 = vadd.f32 0.0, %v407
        %409 = vmatmul.f32.gmra.mxu0 %v370
        %v410 = vpop.f32.mrf.mxu0
        %v411 = vadd.f32 0.0, %v410
        %412 = vdwg.mxu0
        %s413 = scalar_lea.vmem %s146, 64 [#allocation8]
        %414 = vst.msk [vmem:[%s413] sm:$0xff] %vm168, %v390
        %415 = vst.msk [vmem:[%s413 + $0x8] sm:$0xff] %vm168, %v393
        %416 = vst.msk [vmem:[%s413 + $0x10] sm:$0xff] %vm168, %v396
        %417 = vst.msk [vmem:[%s413 + $0x18] sm:$0xff] %vm168, %v399
        %418 = vst.msk [vmem:[%s413 + $0x20] sm:$0xff] %vm168, %v402
        %419 = vst.msk [vmem:[%s413 + $0x28] sm:$0xff] %vm168, %v405
        %420 = vst.msk [vmem:[%s413 + $0x30] sm:$0xff] %vm168, %v408
        %421 = vst.msk [vmem:[%s413 + $0x38] sm:$0xff] %vm168, %v411
        %s422 = sadd.s32 %s149, 2
        %s423 = smul.u32 %s422, 2
        %s424 = sld [smem:[#allocation4 + %s423]]
        %s425 = sadd.s32 %s423, 1
        %s426 = sld [smem:[#allocation4 + %s425]]
        %s427 = ssub.s32 %s426, 4
        %s428 = scalar_lea.vmem %s127, 128 [#allocation5]
        %v429 = vld [vmem:[%s428] sm:$0xff]
        %v430 = vld [vmem:[%s428 + $0x8] sm:$0xff]
        %v431 = vld [vmem:[%s428 + $0x10] sm:$0xff]
        %v432 = vld [vmem:[%s428 + $0x18] sm:$0xff]
        %v433 = vld [vmem:[%s428 + $0x20] sm:$0xff]
        %v434 = vld [vmem:[%s428 + $0x28] sm:$0xff]
        %v435 = vld [vmem:[%s428 + $0x30] sm:$0xff]
        %v436 = vld [vmem:[%s428 + $0x38] sm:$0xff]
        %437 = vst.msk [vmem:[#allocation2 + $0x4] sm:$0xff] %vm168, %v429
        %438 = vst.msk [vmem:[#allocation2 + $0xc] sm:$0xff] %vm168, %v430
        %439 = vst.msk [vmem:[#allocation2 + $0x1c] sm:$0xff] %vm168, %v431
        %440 = vst.msk [vmem:[#allocation2 + $0x24] sm:$0xff] %vm168, %v432
        %441 = vst.msk [vmem:[#allocation2 + $0x34] sm:$0xff] %vm168, %v433
        %442 = vst.msk [vmem:[#allocation2 + $0x3c] sm:$0xff] %vm168, %v434
        %443 = vst.msk [vmem:[#allocation2 + $0x4c] sm:$0xff] %vm168, %v435
        %444 = vst.msk [vmem:[#allocation2 + $0x54] sm:$0xff] %vm168, %v436
        %v445 = vperm.slane %v429, 0
        %v446 = vperm.slane %v431, 0
        %v447 = vperm.slane %v433, 0
        %v448 = vperm.slane %v435, 0
        %449 = vst.msk [vmem:[#allocation2] sm:$0xf] %vm181, %v445
        %450 = vst.msk [vmem:[#allocation2 + $0x18] sm:$0xf] %vm181, %v446
        %451 = vst.msk [vmem:[#allocation2 + $0x30] sm:$0xf] %vm181, %v447
        %452 = vst.msk [vmem:[#allocation2 + $0x48] sm:$0xf] %vm181, %v448
        %v453 = vperm.slane %v430, 7
        %v454 = vperm.slane %v432, 7
        %v455 = vperm.slane %v434, 7
        %v456 = vperm.slane %v436, 7
        %457 = vst.msk [vmem:[#allocation2 + $0x14] sm:$0xf] %vm181, %v453
        %458 = vst.msk [vmem:[#allocation2 + $0x2c] sm:$0xf] %vm181, %v454
        %459 = vst.msk [vmem:[#allocation2 + $0x44] sm:$0xf] %vm181, %v455
        %460 = vst.msk [vmem:[#allocation2 + $0x5c] sm:$0xf] %vm181, %v456
        %s461 = scalar_lea.vmem [#allocation2], %s424
        %v462 = vld [vmem:[%s461] sm:$0xff]
        %v463 = vld [vmem:[%s461 + $0x8] sm:$0xff]
        %v464 = vld [vmem:[%s461 + $0x18] sm:$0xff]
        %v465 = vld [vmem:[%s461 + $0x20] sm:$0xff]
        %v466 = vld [vmem:[%s461 + $0x30] sm:$0xff]
        %v467 = vld [vmem:[%s461 + $0x38] sm:$0xff]
        %v468 = vld [vmem:[%s461 + $0x48] sm:$0xff]
        %v469 = vld [vmem:[%s461 + $0x50] sm:$0xff]
        %v470 = vstv %s427
        %v471 = vadd.s32 %v154, %v470
        %vm472 = vcmp.gt.s32.totalorder %v471, 0
        %v473 = vsel %vm472, %v471, 0
        %vm474 = vcmp.lt.s32.totalorder %v473, 15
        %v475 = vsel %vm474, %v473, 15
        %vm476 = vcmp.eq.s32.totalorder %v151, %v475
        %vm477 = vcmp.eq.s32.totalorder %v152, %v475
        %v478 = vsel %vm476, 1, 0
        %v479 = vsel %vm477, 1, 0
        %v480 = vcvt.s32.f32 %v478
        %v481 = vcvt.s32.f32 %v479
        %v483 = vsel %vm168, %v462, 0
        %v486 = vsel %vm168, %v463, 0
        %v489 = vsel %vm168, %v464, 0
        %v492 = vsel %vm168, %v465, 0
        %v495 = vsel %vm168, %v466, 0
        %v498 = vsel %vm168, %v467, 0
        %v501 = vsel %vm168, %v468, 0
        %v504 = vsel %vm168, %v469, 0
        %506 = vmatpush.msra.mxu0 0.0
        %507 = vmatpush.msra.mxu0 0.0
        %508 = vmatpush.msra.mxu0 0.0
        %509 = vmatpush.msra.mxu0 0.0
        %510 = vmatpush.msra.mxu0 0.0
        %511 = vmatpush.msra.mxu0 0.0
        %512 = vmatpush.msra.mxu0 0.0
        %513 = vmatpush.msra.mxu0 0.0
        %514 = vmatpush.msra.mxu0 0.0
        %515 = vmatpush.msra.mxu0 0.0
        %516 = vmatpush.msra.mxu0 0.0
        %517 = vmatpush.msra.mxu0 0.0
        %518 = vmatpush.msra.mxu0 0.0
        %519 = vmatpush.msra.mxu0 0.0
        %520 = vmatpush.msra.mxu0 %v481
        %521 = vmatpush.msra.mxu0 %v480
        %522 = vmatmul.f32.gmra.mxu0 %v483
        %v523 = vpop.f32.mrf.mxu0
        %v524 = vadd.f32 0.0, %v523
        %525 = vmatmul.f32.gmra.mxu0 %v486
        %v526 = vpop.f32.mrf.mxu0
        %v527 = vadd.f32 0.0, %v526
        %528 = vmatmul.f32.gmra.mxu0 %v489
        %v529 = vpop.f32.mrf.mxu0
        %v530 = vadd.f32 0.0, %v529
        %531 = vmatmul.f32.gmra.mxu0 %v492
        %v532 = vpop.f32.mrf.mxu0
        %v533 = vadd.f32 0.0, %v532
        %534 = vmatmul.f32.gmra.mxu0 %v495
        %v535 = vpop.f32.mrf.mxu0
        %v536 = vadd.f32 0.0, %v535
        %537 = vmatmul.f32.gmra.mxu0 %v498
        %v538 = vpop.f32.mrf.mxu0
        %v539 = vadd.f32 0.0, %v538
        %540 = vmatmul.f32.gmra.mxu0 %v501
        %v541 = vpop.f32.mrf.mxu0
        %v542 = vadd.f32 0.0, %v541
        %543 = vmatmul.f32.gmra.mxu0 %v504
        %v544 = vpop.f32.mrf.mxu0
        %v545 = vadd.f32 0.0, %v544
        %546 = vdwg.mxu0
        %s547 = scalar_lea.vmem %s146, 128 [#allocation8]
        %548 = vst.msk [vmem:[%s547] sm:$0xff] %vm168, %v524
        %549 = vst.msk [vmem:[%s547 + $0x8] sm:$0xff] %vm168, %v527
        %550 = vst.msk [vmem:[%s547 + $0x10] sm:$0xff] %vm168, %v530
        %551 = vst.msk [vmem:[%s547 + $0x18] sm:$0xff] %vm168, %v533
        %552 = vst.msk [vmem:[%s547 + $0x20] sm:$0xff] %vm168, %v536
        %553 = vst.msk [vmem:[%s547 + $0x28] sm:$0xff] %vm168, %v539
        %554 = vst.msk [vmem:[%s547 + $0x30] sm:$0xff] %vm168, %v542
        %555 = vst.msk [vmem:[%s547 + $0x38] sm:$0xff] %vm168, %v545
        %s556 = sadd.s32 %s149, 3
        %s557 = smul.u32 %s556, 2
        %s558 = sld [smem:[#allocation4 + %s557]]
        %s559 = sadd.s32 %s557, 1
        %s560 = sld [smem:[#allocation4 + %s559]]
        %s561 = ssub.s32 %s560, 4
        %s562 = scalar_lea.vmem %s127, 192 [#allocation5]
        %v563 = vld [vmem:[%s562] sm:$0xff]
        %v564 = vld [vmem:[%s562 + $0x8] sm:$0xff]
        %v565 = vld [vmem:[%s562 + $0x10] sm:$0xff]
        %v566 = vld [vmem:[%s562 + $0x18] sm:$0xff]
        %v567 = vld [vmem:[%s562 + $0x20] sm:$0xff]
        %v568 = vld [vmem:[%s562 + $0x28] sm:$0xff]
        %v569 = vld [vmem:[%s562 + $0x30] sm:$0xff]
        %v570 = vld [vmem:[%s562 + $0x38] sm:$0xff]
        %571 = vst.msk [vmem:[#allocation2 + $0x4] sm:$0xff] %vm168, %v563
        %572 = vst.msk [vmem:[#allocation2 + $0xc] sm:$0xff] %vm168, %v564
        %573 = vst.msk [vmem:[#allocation2 + $0x1c] sm:$0xff] %vm168, %v565
        %574 = vst.msk [vmem:[#allocation2 + $0x24] sm:$0xff] %vm168, %v566
        %575 = vst.msk [vmem:[#allocation2 + $0x34] sm:$0xff] %vm168, %v567
        %576 = vst.msk [vmem:[#allocation2 + $0x3c] sm:$0xff] %vm168, %v568
        %577 = vst.msk [vmem:[#allocation2 + $0x4c] sm:$0xff] %vm168, %v569
        %578 = vst.msk [vmem:[#allocation2 + $0x54] sm:$0xff] %vm168, %v570
        %v579 = vperm.slane %v563, 0
        %v580 = vperm.slane %v565, 0
        %v581 = vperm.slane %v567, 0
        %v582 = vperm.slane %v569, 0
        %583 = vst.msk [vmem:[#allocation2] sm:$0xf] %vm181, %v579
        %584 = vst.msk [vmem:[#allocation2 + $0x18] sm:$0xf] %vm181, %v580
        %585 = vst.msk [vmem:[#allocation2 + $0x30] sm:$0xf] %vm181, %v581
        %586 = vst.msk [vmem:[#allocation2 + $0x48] sm:$0xf] %vm181, %v582
        %v587 = vperm.slane %v564, 7
        %v588 = vperm.slane %v566, 7
        %v589 = vperm.slane %v568, 7
        %v590 = vperm.slane %v570, 7
        %591 = vst.msk [vmem:[#allocation2 + $0x14] sm:$0xf] %vm181, %v587
        %592 = vst.msk [vmem:[#allocation2 + $0x2c] sm:$0xf] %vm181, %v588
        %593 = vst.msk [vmem:[#allocation2 + $0x44] sm:$0xf] %vm181, %v589
        %594 = vst.msk [vmem:[#allocation2 + $0x5c] sm:$0xf] %vm181, %v590
        %s595 = scalar_lea.vmem [#allocation2], %s558
        %v596 = vld [vmem:[%s595] sm:$0xff]
        %v597 = vld [vmem:[%s595 + $0x8] sm:$0xff]
        %v598 = vld [vmem:[%s595 + $0x18] sm:$0xff]
        %v599 = vld [vmem:[%s595 + $0x20] sm:$0xff]
        %v600 = vld [vmem:[%s595 + $0x30] sm:$0xff]
        %v601 = vld [vmem:[%s595 + $0x38] sm:$0xff]
        %v602 = vld [vmem:[%s595 + $0x48] sm:$0xff]
        %v603 = vld [vmem:[%s595 + $0x50] sm:$0xff]
        %v604 = vstv %s561
        %v605 = vadd.s32 %v154, %v604
        %vm606 = vcmp.gt.s32.totalorder %v605, 0
        %v607 = vsel %vm606, %v605, 0
        %vm608 = vcmp.lt.s32.totalorder %v607, 15
        %v609 = vsel %vm608, %v607, 15
        %vm610 = vcmp.eq.s32.totalorder %v151, %v609
        %vm611 = vcmp.eq.s32.totalorder %v152, %v609
        %v612 = vsel %vm610, 1, 0
        %v613 = vsel %vm611, 1, 0
        %v614 = vcvt.s32.f32 %v612
        %v615 = vcvt.s32.f32 %v613
        %v617 = vsel %vm168, %v596, 0
        %v620 = vsel %vm168, %v597, 0
        %v623 = vsel %vm168, %v598, 0
        %v626 = vsel %vm168, %v599, 0
        %v629 = vsel %vm168, %v600, 0
        %v632 = vsel %vm168, %v601, 0
        %v635 = vsel %vm168, %v602, 0
        %v638 = vsel %vm168, %v603, 0
        %640 = vmatpush.msra.mxu0 0.0
        %641 = vmatpush.msra.mxu0 0.0
        %642 = vmatpush.msra.mxu0 0.0
        %643 = vmatpush.msra.mxu0 0.0
        %644 = vmatpush.msra.mxu0 0.0
        %645 = vmatpush.msra.mxu0 0.0
        %646 = vmatpush.msra.mxu0 0.0
        %647 = vmatpush.msra.mxu0 0.0
        %648 = vmatpush.msra.mxu0 0.0
        %649 = vmatpush.msra.mxu0 0.0
        %650 = vmatpush.msra.mxu0 0.0
        %651 = vmatpush.msra.mxu0 0.0
        %652 = vmatpush.msra.mxu0 0.0
        %653 = vmatpush.msra.mxu0 0.0
        %654 = vmatpush.msra.mxu0 %v615
        %655 = vmatpush.msra.mxu0 %v614
        %656 = vmatmul.f32.gmra.mxu0 %v617
        %v657 = vpop.f32.mrf.mxu0
        %v658 = vadd.f32 0.0, %v657
        %659 = vmatmul.f32.gmra.mxu0 %v620
        %v660 = vpop.f32.mrf.mxu0
        %v661 = vadd.f32 0.0, %v660
        %662 = vmatmul.f32.gmra.mxu0 %v623
        %v663 = vpop.f32.mrf.mxu0
        %v664 = vadd.f32 0.0, %v663
        %665 = vmatmul.f32.gmra.mxu0 %v626
        %v666 = vpop.f32.mrf.mxu0
        %v667 = vadd.f32 0.0, %v666
        %668 = vmatmul.f32.gmra.mxu0 %v629
        %v669 = vpop.f32.mrf.mxu0
        %v670 = vadd.f32 0.0, %v669
        %671 = vmatmul.f32.gmra.mxu0 %v632
        %v672 = vpop.f32.mrf.mxu0
        %v673 = vadd.f32 0.0, %v672
        %674 = vmatmul.f32.gmra.mxu0 %v635
        %v675 = vpop.f32.mrf.mxu0
        %v676 = vadd.f32 0.0, %v675
        %677 = vmatmul.f32.gmra.mxu0 %v638
        %v678 = vpop.f32.mrf.mxu0
        %v679 = vadd.f32 0.0, %v678
        %680 = vdwg.mxu0
        %s681 = scalar_lea.vmem %s146, 192 [#allocation8]
        %682 = vst.msk [vmem:[%s681] sm:$0xff] %vm168, %v658
        %683 = vst.msk [vmem:[%s681 + $0x8] sm:$0xff] %vm168, %v661
        %684 = vst.msk [vmem:[%s681 + $0x10] sm:$0xff] %vm168, %v664
        %685 = vst.msk [vmem:[%s681 + $0x18] sm:$0xff] %vm168, %v667
        %686 = vst.msk [vmem:[%s681 + $0x20] sm:$0xff] %vm168, %v670
        %687 = vst.msk [vmem:[%s681 + $0x28] sm:$0xff] %vm168, %v673
        %688 = vst.msk [vmem:[%s681 + $0x30] sm:$0xff] %vm168, %v676
        %689 = vst.msk [vmem:[%s681 + $0x38] sm:$0xff] %vm168, %v679
        %s690 = sand.u32 %s61, 1
        %s691 = scalar_lea.sflag [#allocation7], %s690
        %s692 = sand.u32 %s61, 1
        %s693 = smul.addr %s692, 256
        %s694 = scalar_lea.vmem [#allocation8], %s693
        // Predicated region
        $region29: #{tpu_custom_call.1} parent=23 // pred_check
          %p695 = pneg %p71
        $region30: #{tpu_custom_call.1} parent=23 // pred_check_branch
          %697 = sbr.rel (%p695) target = $region32
        $region31: #{tpu_custom_call.1} parent=23 // pred_region
          %s698 = smul.u32 4, %s27
          %700 = vsyncadd %s691, 0
          %s701 = smul.addr %s698, 8
          %s702 = smul.addr %s701, 8
          %s703 = scalar_lea.hbm %s2, %s702
          %s704 = sshll.u32 %s694, 4
          %s705 = int_to_ptr.vmem [resolvable:$true] %s704
          %s706 = sshll.u32 %s703, 4
          %s707 = int_to_ptr.hbm [resolvable:$true] %s706
          %712 = dma.vmem_to_hbm [thread:$0]  %s705, 4096, %s707, %s691, 128, 128, 8
        $region32: #{tpu_custom_call.1} parent=23 // pred_fallthru
          _
      $region24: #{tpu_custom_call.1} parent=5 // pred_fallthru
        _
      %p713 = scmp.le.s32.totalorder 2, %s22
      // Predicated region
      $region33: #{tpu_custom_call.1} parent=5 // pred_check
        %p714 = pneg %p713
      $region34: #{tpu_custom_call.1} parent=5 // pred_check_branch
        %716 = sbr.rel (%p714) target = $region36
      $region35: #{tpu_custom_call.1} parent=5 // pred_region
        %s717 = ssub.s32 %s22, 2
        // Predicated region
        $region37: #{tpu_custom_call.1} parent=35 // pred_check
          %p718 = pneg %p77
        $region38: #{tpu_custom_call.1} parent=35 // pred_check_branch
          %720 = sbr.rel (%p718) target = $region40
        $region39: #{tpu_custom_call.1} parent=35 // pred_region
          %s721 = sand.u32 %s62, 1
          %s722 = scalar_lea.sflag [#allocation7], %s721
          %s723 = sand.u32 %s62, 1
          %s724 = smul.addr %s723, 256
          %s725 = scalar_lea.vmem [#allocation8], %s724
          %727 = dma.done %s722, 4096
        $region40: #{tpu_custom_call.1} parent=35 // pred_fallthru
          _
      $region36: #{tpu_custom_call.1} parent=5 // pred_fallthru
        _
    $region6: #{tpu_custom_call.1} parent=1 // loop_footer
      %s26 = sadd.s32 1, %s22
    $region7: #{tpu_custom_call.1} parent=1 // loop_footer_branch
      %21 = sbr.rel target = $region3
    $region8: #{tpu_custom_call.1} parent=1 // loop_exit
      _
    %728 = vsyncpa [#allocation6], 1
    %s729 = scalar_lea.sflag [#allocation6], 1
    %730 = vsyncpa %s729, 1
    %731 = vsyncpa [#allocation7], 1
    %s732 = scalar_lea.sflag [#allocation7], 1
    %733 = vsyncpa %s732, 1

</llo_original>
